<compile_context>
chip_gen: v7x
topology: tpu7x:2x2x1
jax: 0.10.0
libtpu: 0.0.40
codegen_flags: <defaults>
</compile_context>

<pallas_src>
import functools

import jax
import jax.numpy as jnp
from jax.experimental import pallas as pl
from jax.experimental.pallas import tpu as pltpu

_SUBLANE = 8  # sublane count of a vreg (second-to-last dim granularity)


def _round_up(x, m):
    return ((x + m - 1) // m) * m


# ---------------------------------------------------------------------------
# grad_reverse: identity forward, cotangent * (-eta) backward.
# ---------------------------------------------------------------------------
@functools.partial(jax.custom_vjp, nondiff_argnums=(1,))
def grad_reverse(x, eta=1.0):
    return x


def _grad_reverse_fwd(x, eta):
    return x, None


def _grad_reverse_bwd(eta, _res, g):
    return (-eta * g,)


grad_reverse.defvjp(_grad_reverse_fwd, _grad_reverse_bwd)


# ---------------------------------------------------------------------------
# TensorCore-count probe (2 on v7x, 1 on v5e/v6e). Conservative fallback = 1,
# so single-core parts never pay an extra grid step.
# ---------------------------------------------------------------------------
def _num_tensorcores():
    try:
        info = pltpu.get_tpu_info()
    except Exception:
        return 1
    for attr in ("num_cores", "num_tensorcores", "num_tensor_cores",
                 "tensorcores_per_chip", "cores_per_chip"):
        n = getattr(info, attr, None)
        if isinstance(n, int) and n > 0:
            return n
    return 1


# ---------------------------------------------------------------------------
# Pallas kernel: one (tile_m, H) row-block @ resident (H, C) weight.
# ---------------------------------------------------------------------------
def _classifier_kernel(x_ref, w_ref, b_ref, o_ref, *, inv_temp):
    # x_ref: (TM, H), w_ref: (H, C), b_ref: (1, C), o_ref: (TM, C)
    y = jnp.dot(x_ref[...], w_ref[...], preferred_element_type=jnp.float32)
    y = (y + b_ref[...]) * inv_temp
    o_ref[...] = y.astype(o_ref.dtype)


def classifier_forward(x, w, b, temp, *, tile_m=2048, grad_rev=True, eta=1.0,
                       use_bf16_io=False):
    """Forward pass of the MME RAPID Classifier.

    x:    (B, T, H)  activations (batch_first, like the PyTorch module)
    w:    (H, C)     = W_pytorch.T
    b:    (C,)       bias
    temp: python float temperature
    use_bf16_io: cast x/w to bf16 before the kernel (f32 accumulation kept);
                 ~2x on the HBM-bound read path, slightly different numerics.
    """
    if grad_rev:
        x = grad_reverse(x, eta)  # identity in the forward pass

    B, T, H = x.shape
    C = w.shape[-1]
    M = B * T
    out_dtype = x.dtype

    x2d = x.reshape(M, H)
    b_k = b.reshape(1, C).astype(jnp.float32)
    if use_bf16_io:
        x2d = x2d.astype(jnp.bfloat16)
        w_k = w.astype(jnp.bfloat16)
    else:
        w_k = w.astype(x.dtype)

    # --- row-tile selection ------------------------------------------------
    # Multiple of 8, no larger than the (sublane-rounded) row count.
    tile_m = max(_SUBLANE, _round_up(int(tile_m), _SUBLANE))
    tile_m = min(tile_m, _round_up(M, _SUBLANE))
    # On multi-TensorCore parts (v7x), split a single full-M tile into two
    # grid steps so both cores get work; re-round to a multiple of 8.
    if _num_tensorcores() >= 2 and tile_m >= M and M > _SUBLANE:
        tile_m = _round_up(pl.cdiv(M, 2), _SUBLANE)
    grid_m = pl.cdiv(M, tile_m)  # ragged last block handled by Pallas

    kernel = functools.partial(_classifier_kernel, inv_temp=float(1.0 / temp))

    out2d = pl.pallas_call(
        kernel,
        out_shape=jax.ShapeDtypeStruct((M, C), out_dtype),
        grid_spec=pltpu.PrefetchScalarGridSpec(
            num_scalar_prefetch=0,
            grid=(grid_m,),
            in_specs=[
                pl.BlockSpec((tile_m, H), lambda i: (i, 0)),  # x row tile
                pl.BlockSpec((H, C), lambda i: (0, 0)),       # resident weight
                pl.BlockSpec((1, C), lambda i: (0, 0)),       # resident bias
            ],
            out_specs=pl.BlockSpec((tile_m, C), lambda i: (i, 0)),
        ),
        compiler_params=pltpu.CompilerParams(
            dimension_semantics=("parallel",),
            # Working set is < 2 MiB even at tile_m=2048; default scoped VMEM
            # budget is plenty on all generations, so no vmem_limit override.
        ),
    )(x2d, w_k, b_k)

    return out2d.reshape(B, T, C)


if __name__ == "__main__":
    # Small shapes consistent with the module: batch=2, seq=8, hidden=32, classes=10
    B, T, H, C = 2, 8, 32, 10
    temp = 0.05

    key = jax.random.PRNGKey(0)
    kx, kw, kb = jax.random.split(key, 3)

    x = jax.random.normal(kx, (B, T, H), dtype=jnp.float32)
    # PyTorch Linear weight is (C, H); store its transpose as (H, C).
    w_pt = jax.random.normal(kw, (C, H), dtype=jnp.float32) * (1.0 / jnp.sqrt(H))
    b_pt = jax.random.normal(kb, (C,), dtype=jnp.float32) * 0.01
    w = w_pt.T  # (H, C)

    out = classifier_forward(x, w, b_pt, temp)
    out = jax.block_until_ready(out)

    # Reference check against plain JAX (same math as the PyTorch forward).
    ref = (jnp.einsum("bth,hc->btc", x, w) + b_pt[None, None, :]) / temp
    assert out.shape == (B, T, C)
    assert jnp.allclose(out, ref, atol=1e-4, rtol=1e-4), "mismatch vs reference"

    print("KERNEL_OK")
</pallas_src>

<mosaic_0001>
module attributes {stable_mosaic.version = 11 : i64} {
  func.func @_classifier_kernel(%arg0: i32, %arg1: memref<16x32xf32, #tpu.memory_space<vmem>>, %arg2: memref<32x10xf32, #tpu.memory_space<vmem>>, %arg3: memref<1x10xf32, #tpu.memory_space<vmem>>, %arg4: memref<16x10xf32, #tpu.memory_space<vmem>>) attributes {dimension_semantics = [#tpu.dimension_semantics<parallel>], iteration_bounds = array<i64: 1>, scalar_prefetch = 0 : i64, scratch_operands = 0 : i64, tpu.core_type = #tpu.core_type<tc>, window_params = [{transform_indices = @transform_0, window_bounds = array<i64: 16, 32>}, {pipeline_mode = #tpu.pipeline_mode<synchronous>, transform_indices = @transform_1, window_bounds = array<i64: 32, 10>}, {pipeline_mode = #tpu.pipeline_mode<synchronous>, transform_indices = @transform_2, window_bounds = array<i64: 1, 10>}, {transform_indices = @transform_3, window_bounds = array<i64: 16, 10>}]} {
    %c0 = arith.constant 0 : index
    %c0_0 = arith.constant 0 : index
    %0 = vector.load %arg1[%c0, %c0_0] : memref<16x32xf32, #tpu.memory_space<vmem>>, vector<16x32xf32>
    %c0_1 = arith.constant 0 : index
    %c0_2 = arith.constant 0 : index
    %1 = vector.load %arg2[%c0_1, %c0_2] : memref<32x10xf32, #tpu.memory_space<vmem>>, vector<32x10xf32>
    %cst = arith.constant dense<0.000000e+00> : vector<16x10xf32>
    %2 = tpu.matmul %0, %1, %cst {dimension_numbers = #tpu.dot_dimension_numbers<[1], [0], [0], [1], [0, 0, 1, 1], [], []>} : vector<16x32xf32>, vector<32x10xf32>, vector<16x10xf32> -> vector<16x10xf32>
    %c0_3 = arith.constant 0 : index
    %c0_4 = arith.constant 0 : index
    %3 = vector.load %arg3[%c0_3, %c0_4] : memref<1x10xf32, #tpu.memory_space<vmem>>, vector<1x10xf32>
    %4 = vector.broadcast %3 : vector<1x10xf32> to vector<16x10xf32>
    %5 = arith.addf %2, %4 : vector<16x10xf32>
    %cst_5 = arith.constant 2.000000e+01 : f32
    %6 = vector.broadcast %cst_5 : f32 to vector<16x10xf32>
    %7 = arith.mulf %5, %6 : vector<16x10xf32>
    %c0_6 = arith.constant 0 : index
    %c0_7 = arith.constant 0 : index
    %8 = vector.load %arg4[%c0_6, %c0_7] : memref<16x10xf32, #tpu.memory_space<vmem>>, vector<16x10xf32>
    tpu.vector_store %arg4[%c0_6, %c0_7], %7 {strides = array<i32>} : memref<16x10xf32, #tpu.memory_space<vmem>>, vector<16x10xf32>,
    return
  }
  func.func @transform_0(%arg0: i32) -> (i32, i32) {
    %c0_i32 = arith.constant 0 : i32
    %c0_i32_0 = arith.constant 0 : i32
    return %arg0, %c0_i32 : i32, i32
  }
  func.func @transform_1(%arg0: i32) -> (i32, i32) {
    %c0_i32 = arith.constant 0 : i32
    %c0_i32_0 = arith.constant 0 : i32
    %c0_i32_1 = arith.constant 0 : i32
    return %c0_i32, %c0_i32_0 : i32, i32
  }
  func.func @transform_2(%arg0: i32) -> (i32, i32) {
    %c0_i32 = arith.constant 0 : i32
    %c0_i32_0 = arith.constant 0 : i32
    %c0_i32_1 = arith.constant 0 : i32
    return %c0_i32, %c0_i32_0 : i32, i32
  }
  func.func @transform_3(%arg0: i32) -> (i32, i32) {
    %c0_i32 = arith.constant 0 : i32
    %c0_i32_0 = arith.constant 0 : i32
    return %arg0, %c0_i32 : i32, i32
  }
}

</mosaic_0001>

<llo_original>
// kernel: tpu_custom_call.1
$region0: #{tpu_custom_call.1}
  #allocation0 [shape = 'u32[]', space=smem, size = 0x4, offset = 0x4, fixed_abs, tag = 'smem constant byte address 0x4 - core index']
  #allocation1 [shape = 'u32[144,128]{1,0:T(1,128)}', space=vmem, size = 0x12000, scoped, tag = 'internal scratch']
  %s0 = inlined_call_operand.vmem [shape: f32[16,32], index: 0, kind: input, shape index: {}]
  %s1 = inlined_call_operand.vmem [shape: f32[32,10], index: 1, kind: input, shape index: {}]
  %s2 = inlined_call_operand.vmem [shape: f32[1,10], index: 2, kind: input, shape index: {}]
  %s3 = inlined_call_operand.hbm [shape: f32[16,10], index: 3, kind: output, shape index: {}]
  %s4 = sld [smem:[#allocation0]]
  $region22: #{tpu_custom_call.1} parent=0
    _
  %s6 = ssub.s32 1, %s4
  %s7 = scalar_select 0, %s6, %s4
  $region1: #{tpu_custom_call.1} parent=0
    #allocation2 [shape = 'u8[8192]{0}', space=vmem, size = 0x2000, scoped, tag = 'output window, operand 0, single buffered']
    #allocation3 [shape = 's32[1]{0}', space=sflag, size = 0x4, scoped, tag = 'scoped memory for tpu_custom_call.1']
    %8 = vsyncpa [#allocation3], 0
    // Predicated region
    $region2: #{tpu_custom_call.1} parent=1 // pred_check
      _
    $region3: #{tpu_custom_call.1} parent=1 // pred_check_branch
      %10 = sbr.rel (0) target = $region5
    $region4: #{tpu_custom_call.1} parent=1 // pred_region
      _
    $region5: #{tpu_custom_call.1} parent=1 // pred_fallthru
      _
    // Predicated region
    $region6: #{tpu_custom_call.1} parent=1 // pred_check
      _
    $region7: #{tpu_custom_call.1} parent=1 // pred_check_branch
      %12 = sbr.rel (0) target = $region9
    $region8: #{tpu_custom_call.1} parent=1 // pred_region
      _
    $region9: #{tpu_custom_call.1} parent=1 // pred_fallthru
      _
    // Predicated region
    $region10: #{tpu_custom_call.1} parent=1 // pred_check
      _
    $region11: #{tpu_custom_call.1} parent=1 // pred_check_branch
      %14 = sbr.rel (0) target = $region13
    $region12: #{tpu_custom_call.1} parent=1 // pred_region
      _
    $region13: #{tpu_custom_call.1} parent=1 // pred_fallthru
      _
    %v15 = vld [vmem:[%s0] sm:$0xff]
    %v16 = vld [vmem:[%s0 + $0x8] sm:$0xff]
    %v17 = vld [vmem:[%s1] sm:$0xff]
    %v18 = vld [vmem:[%s1 + $0x8] sm:$0xff]
    %v19 = vld [vmem:[%s1 + $0x10] sm:$0xff]
    %v20 = vld [vmem:[%s1 + $0x18] sm:$0xff]
    %v21 = vld [vmem:[%s2] sm:$0x1]
    %v23 = vlaneseq
    %v24 = vshrl.u32 %v23, 7
    %v25 = vsub.s32 0, %v24
    %v26 = vrot.slane %v21, %v25
    %vm28 = vcmask 261120
    %v30 = vsel %vm28, %v15, 0
    %v33 = vsel %vm28, %v16, 0
    %35 = vmatprep.subr.mxu0 0.0
    %36 = vmatpush1.msra.mxu0 %v17
    %37 = vmatprep.subr.mxu0 0.0
    %38 = vmatpush1.msra.mxu0 %v18
    %39 = vmatprep.subr.mxu0 0.0
    %40 = vmatpush1.msra.mxu0 %v19
    %41 = vmatprep.subr.mxu0 0.0
    %42 = vmatpush1.msra.mxu0 %v20
    %43 = vmatprep.subr.mxu0 0.0
    %44 = vmatpush1.msra.mxu0 0.0
    %45 = vmatprep.subr.mxu0 0.0
    %46 = vmatpush1.msra.mxu0 0.0
    %47 = vmatprep.subr.mxu0 0.0
    %48 = vmatpush1.msra.mxu0 0.0
    %49 = vmatprep.subr.mxu0 0.0
    %50 = vmatpush1.msra.mxu0 0.0
    %51 = vmatprep.subr.mxu0 0.0
    %52 = vmatpush1.msra.mxu0 0.0
    %53 = vmatprep.subr.mxu0 0.0
    %54 = vmatpush1.msra.mxu0 0.0
    %55 = vmatprep.subr.mxu0 0.0
    %56 = vmatpush1.msra.mxu0 0.0
    %57 = vmatprep.subr.mxu0 0.0
    %58 = vmatpush1.msra.mxu0 0.0
    %59 = vmatprep.subr.mxu0 0.0
    %60 = vmatpush1.msra.mxu0 0.0
    %61 = vmatprep.subr.mxu0 0.0
    %62 = vmatpush1.msra.mxu0 0.0
    %63 = vmatprep.subr.mxu0 0.0
    %64 = vmatpush1.msra.mxu0 0.0
    %65 = vmatprep.subr.mxu0 0.0
    %66 = vmatpush1.msra.mxu0 0.0
    %67 = vmatprep.subr.mxu0 0.0
    %68 = vmatpush1.msra.mxu0 0.0
    %69 = vmatprep.subr.mxu0 0.0
    %70 = vmatpush1.msra.mxu0 0.0
    %71 = vmatprep.subr.mxu0 0.0
    %72 = vmatpush1.msra.mxu0 0.0
    %73 = vmatprep.subr.mxu0 0.0
    %74 = vmatpush1.msra.mxu0 0.0
    %75 = vmatprep.subr.mxu0 0.0
    %76 = vmatpush1.msra.mxu0 0.0
    %77 = vmatprep.subr.mxu0 0.0
    %78 = vmatpush1.msra.mxu0 0.0
    %79 = vmatprep.subr.mxu0 0.0
    %80 = vmatpush1.msra.mxu0 0.0
    %81 = vmatprep.subr.mxu0 0.0
    %82 = vmatpush1.msra.mxu0 0.0
    %83 = vmatprep.subr.mxu0 0.0
    %84 = vmatpush1.msra.mxu0 0.0
    %85 = vmatprep.subr.mxu0 0.0
    %86 = vmatpush1.msra.mxu0 0.0
    %87 = vmatprep.subr.mxu0 0.0
    %88 = vmatpush1.msra.mxu0 0.0
    %89 = vmatprep.subr.mxu0 0.0
    %90 = vmatpush1.msra.mxu0 0.0
    %91 = vmatprep.subr.mxu0 0.0
    %92 = vmatpush1.msra.mxu0 0.0
    %93 = vmatprep.subr.mxu0 0.0
    %94 = vmatpush1.msra.mxu0 0.0
    %95 = vmatprep.subr.mxu0 0.0
    %96 = vmatpush1.msra.mxu0 0.0
    %97 = vmatprep.subr.mxu0 0.0
    %98 = vmatpush1.msra.mxu0 0.0
    %99 = vmatprep.mubr.f32.mxu0 0.0
    %100 = vmatmul.mubr.f32.gmra.mrb[0].mxu0 %v30
    %v101 = vpop.f32.mrb[0].mxu0
    %v102 = vadd.f32 %v26, %v101
    %v103 = vpop.f32.mrb[0].mxu0
    %104 = vmatprep.mubr.f32.mxu0 0.0
    %105 = vmatmul.mubr.f32.gmra.mrb[0].mxu0 %v33
    %v106 = vpop.f32.mrb[0].mxu0
    %v107 = vadd.f32 %v26, %v106
    %v108 = vpop.f32.mrb[0].mxu0
    %109 = vdwg.mxu0
    %v110 = vmul.f32 %v102, 20.0
    %v111 = vmul.f32 %v107, 20.0
    %vm112 = vcmask 80896
    %113 = vst.msk [vmem:[#allocation2] sm:$0xff] %vm112, %v110
    %114 = vst.msk [vmem:[#allocation2 + $0x8] sm:$0xff] %vm112, %v111
    // Predicated region
    $region14: #{tpu_custom_call.1} parent=1 // pred_check
      _
    $region15: #{tpu_custom_call.1} parent=1 // pred_check_branch
      %116 = sbr.rel (0) target = $region17
    $region16: #{tpu_custom_call.1} parent=1 // pred_region
      %s118 = ssub.s32 256, 256
      %119 = vsyncadd [#allocation3], %s118
      %s120 = sshll.u32 [#allocation2], 4
      %s121 = int_to_ptr.vmem [resolvable:$true] %s120
      %126 = dma.vmem_to_hbm [thread:$0]  %s121, 256, %s3, [#allocation3], 128, 128, 8
    $region17: #{tpu_custom_call.1} parent=1 // pred_fallthru
      _
    // Predicated region
    $region18: #{tpu_custom_call.1} parent=1 // pred_check
      _
    $region19: #{tpu_custom_call.1} parent=1 // pred_check_branch
      %128 = sbr.rel (0) target = $region21
    $region20: #{tpu_custom_call.1} parent=1 // pred_region
      %129 = dma.done [#allocation3], 256
    $region21: #{tpu_custom_call.1} parent=1 // pred_fallthru
      _
    %130 = vsyncpa [#allocation3], 1

</llo_original>
